<compile_context>
chip_gen: v7x
topology: tpu7x:2x2x1
jax: 0.10.0
libtpu: 0.0.40
codegen_flags: <defaults>
</compile_context>

<pallas_src>
import math

import jax
import jax.numpy as jnp
from jax.experimental import pallas as pl
from jax.experimental.pallas import tpu as pltpu


def _round_up(x: int, m: int) -> int:
    return ((x + m - 1) // m) * m


def _cdiv(a: int, b: int) -> int:
    return -(-a // b)


def _min_sublane(*dtypes) -> int:
    """Minimum row-tile multiple so sub-32-bit dtypes stay sublane-packed."""
    item = min(jnp.dtype(d).itemsize for d in dtypes)
    if item >= 4:
        return 8
    if item == 2:
        return 16
    return 32


# ----------------------------------------------------------------------------
# CE kernels
# ----------------------------------------------------------------------------
def _make_ce_single_kernel(with_c: bool):
    """One (TR, TN) tile holds the whole (folded) feature axis: no accumulators."""

    def kernel(x_ref, t_ref, o_ref):
        x = x_ref[...].astype(jnp.float32)
        t = t_ref[...].astype(jnp.float32)
        s = jnp.sum(t * (jnp.log(t + 1e-08) - x), axis=1, keepdims=True)     # (TR,1)
        m = jnp.max(x, axis=1, keepdims=True)                                 # (TR,1)
        lse = m + jnp.log(jnp.sum(jnp.exp(x - m), axis=1, keepdims=True))     # (TR,1)
        lane = jax.lax.broadcasted_iota(jnp.int32, o_ref.shape, 1)
        if with_c:
            c = jnp.sum(t, axis=1, keepdims=True)                             # (TR,1)
            o_ref[...] = jnp.where(lane == 0, lse, jnp.where(lane == 1, s, c))
        else:
            o_ref[...] = jnp.where(lane == 0, lse, s)

    return kernel


def _make_ce_multi_kernel(with_c: bool):
    """Online-LSE accumulation over multiple feature tiles (write-on-first-step)."""

    def kernel(x_ref, t_ref, o_ref, m_scr, l_scr, s_scr, *rest):
        j = pl.program_id(1)
        x = x_ref[...].astype(jnp.float32)
        t = t_ref[...].astype(jnp.float32)
        sv = t * (jnp.log(t + 1e-08) - x)                      # fused loss + bias term
        rmax = jnp.max(x, axis=1, keepdims=True)

        @pl.when(j == 0)
        def _first():
            # Write-on-first-step: no zero-init pass, no step-0 accumulator loads.
            s_scr[...] = sv
            m_scr[...] = rmax
            l_scr[...] = jnp.exp(x - rmax)
            if with_c:
                rest[0][...] = t

        @pl.when(j > 0)
        def _acc():
            s_scr[...] += sv
            if with_c:
                rest[0][...] += t
            m_prev = m_scr[...]
            m_new = jnp.maximum(m_prev, rmax)
            l_scr[...] = l_scr[...] * jnp.exp(m_prev - m_new) + jnp.exp(x - m_new)
            m_scr[...] = m_new

        @pl.when(j == pl.num_programs(1) - 1)
        def _fin():
            lse = m_scr[...] + jnp.log(jnp.sum(l_scr[...], axis=1, keepdims=True))
            s = jnp.sum(s_scr[...], axis=1, keepdims=True)
            lane = jax.lax.broadcasted_iota(jnp.int32, o_ref.shape, 1)
            if with_c:
                c = jnp.sum(rest[0][...], axis=1, keepdims=True)
                o_ref[...] = jnp.where(lane == 0, lse, jnp.where(lane == 1, s, c))
            else:
                o_ref[...] = jnp.where(lane == 0, lse, s)

    return kernel


# ----------------------------------------------------------------------------
# MSE kernel
# ----------------------------------------------------------------------------
def _vreg_partial_sum(v):
    """(TR, TN) f32 -> (8, 128) per-lane partial sums.

    Only vreg-aligned static slices + VALU adds (no cross-lane XLU reduce, no masked
    stores).  Requires TR % 8 == 0 and TN % 128 == 0 (guaranteed by the driver).
    """
    tr, tn = v.shape
    acc = v[:, 0:128]
    for k in range(1, tn // 128):
        acc = acc + v[:, k * 128:(k + 1) * 128]
    out = acc[0:8, :]
    for k in range(1, tr // 8):
        out = out + acc[k * 8:(k + 1) * 8, :]
    return out


def _mse_kernel(x_ref, t_ref, o_ref):
    d = x_ref[...].astype(jnp.float32) - t_ref[...].astype(jnp.float32)
    o_ref[...] = _vreg_partial_sum(d * d)


# ----------------------------------------------------------------------------
# Drivers
# ----------------------------------------------------------------------------
def _cross_entropy_softlabel_mean_adjust(x, t, normalized_target: bool = False):
    """Equivalent of _cross_entropy_with_softlabel(..., adjust=True, reduction='mean')."""
    b = x.shape[0]
    n = int(x.size) // b
    x2 = jnp.reshape(x, (b, n))
    t2 = jnp.reshape(t, (b, n))

    min_tr = _min_sublane(x2.dtype, t2.dtype)

    # Fold features into sublanes so small batches fill 8x128 vregs.  Keep growing the
    # fold (while the feature axis stays lane-dense) until there are >= 2 row blocks so
    # the "parallel" grid axis actually shards across v7x's two TensorCores.
    fold = min_tr // math.gcd(b, min_tr)          # b * fold is a multiple of min_tr
    while b * fold < 2 * min_tr and n // (2 * fold) >= 128:
        fold *= 2
    r = b * fold

    nf_raw = _cdiv(n, fold)
    if nf_raw <= 2048:
        tn = _round_up(nf_raw, 128)
        nf = tn
    else:
        tn = 2048
        nf = _round_up(nf_raw, tn)
    single_tile = (nf == tn)

    pad = fold * nf - n
    if pad:
        if jnp.issubdtype(x2.dtype, jnp.floating):
            # Finite large-negative (NOT -inf): with t=0 padding the linear term is
            # 0 * (finite huge) = 0 and exp(pad - rowmax) underflows to exactly 0, so
            # padded lanes / all-padding fold rows combine exactly in the wrapper.
            neg = float(jnp.finfo(x2.dtype).min) / 2.0
        else:
            neg = int(-(2 ** 30))
        x2 = jnp.pad(x2, ((0, 0), (0, pad)), constant_values=neg)
        t2 = jnp.pad(t2, ((0, 0), (0, pad)), constant_values=0)

    xf = jnp.reshape(x2, (r, nf))
    tf = jnp.reshape(t2, (r, nf))

    # Row tile: largest candidate (capped at 128 to keep VMEM scratch small) that still
    # gives >= 2 row blocks; dtype-aware minimum for sublane packing.
    tr = r
    for cand in (128, 64, 32, 16, 8):
        if cand >= min_tr and r % cand == 0 and r // cand >= 2:
            tr = cand
            break

    with_c = not normalized_target
    itemsize = xf.dtype.itemsize + tf.dtype.itemsize
    cost = pl.CostEstimate(
        flops=int(10 * r * nf),
        transcendentals=int(2 * r * nf),
        bytes_accessed=int(r * nf * itemsize + r * 128 * 4),
    )
    out_shape = jax.ShapeDtypeStruct((r, 128), jnp.float32)

    if single_tile:
        packed = pl.pallas_call(
            _make_ce_single_kernel(with_c),
            out_shape=out_shape,
            grid_spec=pltpu.PrefetchScalarGridSpec(
                num_scalar_prefetch=0,
                grid=(r // tr,),
                in_specs=[
                    pl.BlockSpec((tr, tn), lambda i: (i, 0)),
                    pl.BlockSpec((tr, tn), lambda i: (i, 0)),
                ],
                out_specs=pl.BlockSpec((tr, 128), lambda i: (i, 0)),
            ),
            compiler_params=pltpu.CompilerParams(
                dimension_semantics=("parallel",)),
            cost_estimate=cost,
        )(xf, tf)
    else:
        scratch = [
            pltpu.VMEM((tr, 1), jnp.float32),    # running per-row max
            pltpu.VMEM((tr, tn), jnp.float32),   # per-lane exp-sum
            pltpu.VMEM((tr, tn), jnp.float32),   # per-lane fused loss + bias
        ]
        if with_c:
            scratch.append(pltpu.VMEM((tr, tn), jnp.float32))   # per-lane sum of t
        packed = pl.pallas_call(
            _make_ce_multi_kernel(with_c),
            out_shape=out_shape,
            grid_spec=pltpu.PrefetchScalarGridSpec(
                num_scalar_prefetch=0,
                grid=(r // tr, nf // tn),
                in_specs=[
                    pl.BlockSpec((tr, tn), lambda i, j: (i, j)),
                    pl.BlockSpec((tr, tn), lambda i, j: (i, j)),
                ],
                out_specs=pl.BlockSpec((tr, 128), lambda i, j: (i, 0)),
                scratch_shapes=scratch,
            ),
            compiler_params=pltpu.CompilerParams(
                dimension_semantics=("parallel", "arbitrary")),
            cost_estimate=cost,
        )(xf, tf)

    # Combine the FOLD folds of each original row.  This is exact: max/sum are
    # associative and LSE combines via logsumexp of the per-fold LSEs (all-padding
    # fold rows yield a finite ~-1.7e38 LSE whose exp underflows to 0).
    lse_f = packed[:, 0]
    s_f = packed[:, 1]
    lse_b = jax.nn.logsumexp(jnp.reshape(lse_f, (b, fold)), axis=1)   # (B,)
    s_b = jnp.sum(jnp.reshape(s_f, (b, fold)), axis=1)                # (B,)
    if with_c:
        c_b = jnp.sum(jnp.reshape(packed[:, 2], (b, fold)), axis=1)   # (B,)
        loss_rows = s_b + lse_b * c_b
    else:
        # Targets are normalized distributions: sum_j t == 1 per original row.
        loss_rows = s_b + lse_b
    return jnp.sum(loss_rows) * (1.0 / b)


def _mse_mean(x, t):
    """Equivalent of F.mse_loss(x, t) (mean over all elements)."""
    total = int(x.size)
    xf = jnp.reshape(x, (-1,))
    tf = jnp.reshape(t, (-1,))

    sub = _min_sublane(xf.dtype, tf.dtype)
    if total >= sub * 2048:
        tn = 2048
    else:
        tn = max(128, _round_up(_cdiv(total, sub), 128))
    rows = _cdiv(total, tn)
    tr = min(256, _round_up(rows, sub))
    r = _round_up(rows, tr)

    pad = r * tn - total
    if pad:
        xf = jnp.pad(xf, (0, pad))       # zero padding contributes 0 to the sum
        tf = jnp.pad(tf, (0, pad))
    x2 = jnp.reshape(xf, (r, tn))
    t2 = jnp.reshape(tf, (r, tn))

    nblk = r // tr
    cost = pl.CostEstimate(
        flops=int(3 * r * tn),
        transcendentals=0,
        bytes_accessed=int(r * tn * (x2.dtype.itemsize + t2.dtype.itemsize)
                           + nblk * 8 * 128 * 4),
    )

    partial = pl.pallas_call(
        _mse_kernel,
        out_shape=jax.ShapeDtypeStruct((8 * nblk, 128), jnp.float32),
        grid_spec=pltpu.PrefetchScalarGridSpec(
            num_scalar_prefetch=0,
            grid=(nblk,),
            in_specs=[
                pl.BlockSpec((tr, tn), lambda i: (i, 0)),
                pl.BlockSpec((tr, tn), lambda i: (i, 0)),
            ],
            out_specs=pl.BlockSpec((8, 128), lambda i: (i, 0)),
        ),
        compiler_params=pltpu.CompilerParams(dimension_semantics=("parallel",)),
        cost_estimate=cost,
    )(x2, t2)

    return jnp.sum(partial) * (1.0 / total)


# ----------------------------------------------------------------------------
# Module wrapper
# ----------------------------------------------------------------------------
class Loss:
    """JAX/Pallas port of the PyTorch `Loss` module (forward pass only).

    normalized_target=True asserts that each target row sums to 1 (standard soft
    labels), allowing the kernel to drop the sum-of-targets accumulator.  Default
    False preserves the exact PyTorch formula for arbitrary targets.
    """

    def __init__(self, loss_type: str, normalized_target: bool = False):
        self.loss_type = loss_type
        self.normalized_target = normalized_target

    def __call__(self, inputs, target):
        if self.loss_type == "ce":
            return _cross_entropy_softlabel_mean_adjust(
                inputs, target, self.normalized_target)
        elif self.loss_type == "mse":
            return _mse_mean(inputs, target)
        else:
            raise AssertionError(f"Unsupported loss type {self.loss_type}.")


# ----------------------------------------------------------------------------
# Pure-JAX references for correctness checking
# ----------------------------------------------------------------------------
def _ref_ce(inputs, target):
    b = inputs.shape[0]
    x = jnp.reshape(inputs, (b, -1)).astype(jnp.float32)
    t = jnp.reshape(target, (b, -1)).astype(jnp.float32)
    logprobs = jax.nn.log_softmax(x, axis=1)
    batchloss = -jnp.sum(t * logprobs, axis=1)
    bias = jnp.sum(t * jnp.log(t + 1e-08), axis=1)
    return jnp.mean(batchloss + bias)


def _ref_mse(inputs, target):
    d = inputs.astype(jnp.float32) - target.astype(jnp.float32)
    return jnp.mean(d * d)


# ----------------------------------------------------------------------------
# Main
# ----------------------------------------------------------------------------
if __name__ == "__main__":
    key = jax.random.PRNGKey(0)
    k1, k2, k3, k4, k5 = jax.random.split(key, 5)

    # Small NCHW-shaped logits / targets, consistent with a conv-net head.
    B, C, H, W = 2, 4, 16, 16
    x = jax.random.normal(k1, (B, C, H, W), dtype=jnp.float32)

    # Soft-label target: a valid per-row distribution over the flattened axis.
    t_logits = jax.random.normal(k2, (B, C * H * W), dtype=jnp.float32)
    t = jax.nn.softmax(t_logits, axis=1).reshape(B, C, H, W)

    # Regression-style target for MSE.
    t_mse = jax.random.normal(k3, (B, C, H, W), dtype=jnp.float32)

    # --- cross-entropy with soft labels (single-tile path, exact PyTorch formula) ---
    ce_out = jax.block_until_ready(Loss("ce")(x, t))
    ce_ref = jax.block_until_ready(_ref_ce(x, t))
    assert jnp.allclose(ce_out, ce_ref, rtol=1e-4, atol=1e-5), (ce_out, ce_ref)

    # --- same inputs, normalized-target fast path (drops sum-of-targets stat) ---
    ce_out_n = jax.block_until_ready(Loss("ce", normalized_target=True)(x, t))
    assert jnp.allclose(ce_out_n, ce_ref, rtol=1e-4, atol=1e-5), (ce_out_n, ce_ref)

    # --- longer feature axis to exercise the multi-tile online-LSE path ---
    B2, N2 = 8, 6144
    x2 = jax.random.normal(k4, (B2, N2), dtype=jnp.float32)
    t2 = jax.nn.softmax(jax.random.normal(k5, (B2, N2), dtype=jnp.float32), axis=1)
    ce2_out = jax.block_until_ready(Loss("ce")(x2, t2))
    ce2_ref = jax.block_until_ready(_ref_ce(x2, t2))
    assert jnp.allclose(ce2_out, ce2_ref, rtol=1e-4, atol=1e-5), (ce2_out, ce2_ref)

    # --- mse ---
    mse_out = jax.block_until_ready(Loss("mse")(x, t_mse))
    mse_ref = jax.block_until_ready(_ref_mse(x, t_mse))
    assert jnp.allclose(mse_out, mse_ref, rtol=1e-4, atol=1e-5), (mse_out, mse_ref)

    print("KERNEL_OK")
</pallas_src>

<mosaic_0001>
module attributes {stable_mosaic.version = 11 : i64} {
  func.func @kernel(%arg0: i32, %arg1: memref<8x128xf32, #tpu.memory_space<vmem>>, %arg2: memref<8x128xf32, #tpu.memory_space<vmem>>, %arg3: memref<8x128xf32, #tpu.memory_space<vmem>>) attributes {dimension_semantics = [#tpu.dimension_semantics<parallel>], iteration_bounds = array<i64: 2>, scalar_prefetch = 0 : i64, scratch_operands = 0 : i64, tpu.core_type = #tpu.core_type<tc>, window_params = [{transform_indices = @transform_0, window_bounds = array<i64: 8, 128>}, {transform_indices = @transform_1, window_bounds = array<i64: 8, 128>}, {transform_indices = @transform_2, window_bounds = array<i64: 8, 128>}]} {
    %c0 = arith.constant 0 : index
    %c0_0 = arith.constant 0 : index
    %0 = vector.load %arg1[%c0, %c0_0] : memref<8x128xf32, #tpu.memory_space<vmem>>, vector<8x128xf32>
    %c0_1 = arith.constant 0 : index
    %c0_2 = arith.constant 0 : index
    %1 = vector.load %arg2[%c0_1, %c0_2] : memref<8x128xf32, #tpu.memory_space<vmem>>, vector<8x128xf32>
    %cst = arith.constant 9.99999993E-9 : f32
    %2 = vector.broadcast %cst : f32 to vector<8x128xf32>
    %3 = arith.addf %1, %2 : vector<8x128xf32>
    %4 = math.log %3 : vector<8x128xf32>
    %5 = arith.subf %4, %0 : vector<8x128xf32>
    %6 = arith.mulf %1, %5 : vector<8x128xf32>
    %cst_3 = arith.constant dense<0.000000e+00> : vector<8xf32>
    %7 = vector.multi_reduction <add>, %6, %cst_3 [1] : vector<8x128xf32> to vector<8xf32>
    %8 = vector.shape_cast %7 : vector<8xf32> to vector<8x1xf32>
    %cst_4 = arith.constant dense<0xFF800000> : vector<8xf32>
    %9 = vector.multi_reduction <maximumf>, %0, %cst_4 [1] : vector<8x128xf32> to vector<8xf32>
    %10 = vector.shape_cast %9 : vector<8xf32> to vector<8x1xf32>
    %11 = vector.broadcast %10 : vector<8x1xf32> to vector<8x128xf32>
    %12 = arith.subf %0, %11 : vector<8x128xf32>
    %13 = math.exp %12 : vector<8x128xf32>
    %cst_5 = arith.constant dense<0.000000e+00> : vector<8xf32>
    %14 = vector.multi_reduction <add>, %13, %cst_5 [1] : vector<8x128xf32> to vector<8xf32>
    %15 = vector.shape_cast %14 : vector<8xf32> to vector<8x1xf32>
    %16 = math.log %15 : vector<8x1xf32>
    %17 = arith.addf %10, %16 : vector<8x1xf32>
    %18 = tpu.iota {dimensions = array<i32: 1>} : vector<8x128xi32>
    %cst_6 = arith.constant dense<0.000000e+00> : vector<8xf32>
    %19 = vector.multi_reduction <add>, %1, %cst_6 [1] : vector<8x128xf32> to vector<8xf32>
    %20 = vector.shape_cast %19 : vector<8xf32> to vector<8x1xf32>
    %c0_i32 = arith.constant 0 : i32
    %21 = vector.broadcast %c0_i32 : i32 to vector<8x128xi32>
    %22 = arith.cmpi eq, %18, %21 : vector<8x128xi32>
    %c1_i32 = arith.constant 1 : i32
    %23 = vector.broadcast %c1_i32 : i32 to vector<8x128xi32>
    %24 = arith.cmpi eq, %18, %23 : vector<8x128xi32>
    %25 = vector.shape_cast %8 : vector<8x1xf32> to vector<8x1xf32>
    %26 = vector.broadcast %25 : vector<8x1xf32> to vector<8x128xf32>
    %27 = vector.shape_cast %20 : vector<8x1xf32> to vector<8x1xf32>
    %28 = vector.broadcast %27 : vector<8x1xf32> to vector<8x128xf32>
    %29 = arith.select %24, %26, %28 : vector<8x128xi1>, vector<8x128xf32>
    %30 = vector.shape_cast %17 : vector<8x1xf32> to vector<8x1xf32>
    %31 = vector.broadcast %30 : vector<8x1xf32> to vector<8x128xf32>
    %32 = arith.select %22, %31, %29 : vector<8x128xi1>, vector<8x128xf32>
    %c0_7 = arith.constant 0 : index
    %c0_8 = arith.constant 0 : index
    %33 = vector.load %arg3[%c0_7, %c0_8] : memref<8x128xf32, #tpu.memory_space<vmem>>, vector<8x128xf32>
    tpu.vector_store %arg3[%c0_7, %c0_8], %32 {strides = array<i32>} : memref<8x128xf32, #tpu.memory_space<vmem>>, vector<8x128xf32>,
    return
  }
  func.func @transform_0(%arg0: i32) -> (i32, i32) {
    %c0_i32 = arith.constant 0 : i32
    %c0_i32_0 = arith.constant 0 : i32
    return %arg0, %c0_i32 : i32, i32
  }
  func.func @transform_1(%arg0: i32) -> (i32, i32) {
    %c0_i32 = arith.constant 0 : i32
    %c0_i32_0 = arith.constant 0 : i32
    return %arg0, %c0_i32 : i32, i32
  }
  func.func @transform_2(%arg0: i32) -> (i32, i32) {
    %c0_i32 = arith.constant 0 : i32
    %c0_i32_0 = arith.constant 0 : i32
    return %arg0, %c0_i32 : i32, i32
  }
}

</mosaic_0001>

<llo_original>
// kernel: tpu_custom_call.1
$region0: #{tpu_custom_call.1}
  #allocation0 [shape = 'u32[]', space=smem, size = 0x4, offset = 0x4, fixed_abs, tag = 'smem constant byte address 0x4 - core index']
  #allocation1 [shape = 'u32[144,128]{1,0:T(1,128)}', space=vmem, size = 0x12000, scoped, tag = 'internal scratch']
  %s0 = inlined_call_operand.hbm [shape: f32[16,128], index: 0, kind: input, shape index: {}]
  %s1 = inlined_call_operand.hbm [shape: f32[16,128], index: 1, kind: input, shape index: {}]
  %s2 = inlined_call_operand.hbm [shape: f32[16,128], index: 2, kind: output, shape index: {}]
  %s3 = sld [smem:[#allocation0]]
  $region49: #{tpu_custom_call.1} parent=0
    _
  %s5 = ssub.s32 1, %s3
  %s6 = scalar_select 0, %s5, %s3
  $region1: #{tpu_custom_call.1} parent=0
    #allocation2 [shape = 'u8[8192]{0}', space=vmem, size = 0x2000, scoped, tag = 'input window, operand 0']
    #allocation3 [shape = 's32[2]{0}', space=sflag, size = 0x8, scoped, tag = 'scoped memory for tpu_custom_call.1']
    #allocation4 [shape = 's32[2]{0}', space=sflag, size = 0x8, scoped, tag = 'scoped memory for tpu_custom_call.1']
    #allocation5 [shape = 'u8[8192]{0}', space=vmem, size = 0x2000, scoped, tag = 'input window, operand 1']
    #allocation6 [shape = 's32[2]{0}', space=sflag, size = 0x8, scoped, tag = 'scoped memory for tpu_custom_call.1']
    #allocation7 [shape = 'u8[8192]{0}', space=vmem, size = 0x2000, scoped, tag = 'output window, operand 0']
    %7 = vsyncpa [#allocation3], 0
    %s8 = scalar_lea.sflag [#allocation3], 1
    %9 = vsyncpa %s8, 0
    %10 = vsyncpa [#allocation6], 0
    %s11 = scalar_lea.sflag [#allocation6], 1
    %12 = vsyncpa %s11, 0
    %13 = vsyncpa [#allocation4], 0
    %s14 = scalar_lea.sflag [#allocation4], 1
    %15 = vsyncpa %s14, 0
    loop: start=0, step=1, limit=4
    $region2: #{tpu_custom_call.1} parent=1 // loop_pre_header
      _
    $region3: #{tpu_custom_call.1} parent=1 // loop_header
      %s17 = sphi 0, %s21
      %p18 = scmp.ge.s32.totalorder %s17, 4
      %s27 = sphi 0, %s29
      %s30 = sphi 0, %s27
      %s31 = sphi 0, %s30
      %s47 = sphi 0, %s31
      %s53 = sphi 0, %s55
      %s56 = sphi 0, %s53
      %s57 = sphi 0, %s56
      %s73 = sphi 0, %s57
      %s79 = sphi 0, %s81
      %s82 = sphi 0, %s79
      %s83 = sphi 0, %s82
      %s99 = sphi 0, %s83
    $region4: #{tpu_custom_call.1} parent=1 // loop_header_branch
      %20 = sbr.rel (%p18) target = $region8
    $region5: #{tpu_custom_call.1} parent=1 // loop_body
      %s22 = ssub.s32 %s17, 1
      %s23 = ssub.s32 %s17, 2
      %s24 = sadd.s32 %s17, 1
      %s25 = ssub.s32 %s17, %s24
      %p26 = scmp.eq.s32.totalorder %s25, 0
      %s28 = sadd.s32 %s27, 1
      %s29 = scalar_select %p26, %s27, %s28
      %p32 = pneg %p26
      %p33 = scmp.eq.s32.totalorder %s17, 1
      %p34 = por %p32, %p33
      %p35 = scmp.ne.s32.totalorder %s27, %s30
      %p36 = scmp.eq.s32.totalorder %s17, 0
      %p37 = por %p35, %p36
      %p38 = scmp.ne.s32.totalorder %s27, %s30
      %p39 = scmp.eq.s32.totalorder %s22, 1
      %p40 = por %p38, %p39
      %p41 = scmp.ne.s32.totalorder %s30, %s31
      %p42 = scmp.eq.s32.totalorder %s22, 0
      %p43 = por %p41, %p42
      %p44 = scmp.ne.s32.totalorder %s30, %s31
      %p45 = scmp.eq.s32.totalorder %s23, 1
      %p46 = por %p44, %p45
      %p48 = scmp.ne.s32.totalorder %s31, %s47
      %p49 = scmp.eq.s32.totalorder %s23, 0
      %p50 = por %p48, %p49
      %s51 = ssub.s32 %s17, %s24
      %p52 = scmp.eq.s32.totalorder %s51, 0
      %s54 = sadd.s32 %s53, 1
      %s55 = scalar_select %p52, %s53, %s54
      %p58 = pneg %p52
      %p59 = scmp.eq.s32.totalorder %s17, 1
      %p60 = por %p58, %p59
      %p61 = scmp.ne.s32.totalorder %s53, %s56
      %p62 = scmp.eq.s32.totalorder %s17, 0
      %p63 = por %p61, %p62
      %p64 = scmp.ne.s32.totalorder %s53, %s56
      %p65 = scmp.eq.s32.totalorder %s22, 1
      %p66 = por %p64, %p65
      %p67 = scmp.ne.s32.totalorder %s56, %s57
      %p68 = scmp.eq.s32.totalorder %s22, 0
      %p69 = por %p67, %p68
      %p70 = scmp.ne.s32.totalorder %s56, %s57
      %p71 = scmp.eq.s32.totalorder %s23, 1
      %p72 = por %p70, %p71
      %p74 = scmp.ne.s32.totalorder %s57, %s73
      %p75 = scmp.eq.s32.totalorder %s23, 0
      %p76 = por %p74, %p75
      %s77 = ssub.s32 %s17, %s24
      %p78 = scmp.eq.s32.totalorder %s77, 0
      %s80 = sadd.s32 %s79, 1
      %s81 = scalar_select %p78, %s79, %s80
      %p84 = pneg %p78
      %p85 = scmp.eq.s32.totalorder %s17, 1
      %p86 = por %p84, %p85
      %p87 = scmp.ne.s32.totalorder %s79, %s82
      %p88 = scmp.eq.s32.totalorder %s17, 0
      %p89 = por %p87, %p88
      %p90 = scmp.ne.s32.totalorder %s79, %s82
      %p91 = scmp.eq.s32.totalorder %s22, 1
      %p92 = por %p90, %p91
      %p93 = scmp.ne.s32.totalorder %s82, %s83
      %p94 = scmp.eq.s32.totalorder %s22, 0
      %p95 = por %p93, %p94
      %p96 = scmp.ne.s32.totalorder %s82, %s83
      %p97 = scmp.eq.s32.totalorder %s23, 1
      %p98 = por %p96, %p97
      %p100 = scmp.ne.s32.totalorder %s83, %s99
      %p101 = scmp.eq.s32.totalorder %s23, 0
      %p102 = por %p100, %p101
      %p103 = scmp.le.s32.totalorder 1, %s17
      %p104 = scmp.lt.s32.totalorder %s17, 3
      %p105 = pnand %p103, %p104
      %p106 = pneg %p105
      // Predicated region
      $region9: #{tpu_custom_call.1} parent=5 // pred_check
        _
      $region10: #{tpu_custom_call.1} parent=5 // pred_check_branch
        %108 = sbr.rel (%p105) target = $region12
      $region11: #{tpu_custom_call.1} parent=5 // pred_region
        %s109 = ssub.s32 %s17, 1
      $region12: #{tpu_custom_call.1} parent=5 // pred_fallthru
        _
      %p110 = scmp.lt.s32.totalorder %s17, 2
      // Predicated region
      $region13: #{tpu_custom_call.1} parent=5 // pred_check
        %p111 = pneg %p110
      $region14: #{tpu_custom_call.1} parent=5 // pred_check_branch
        %113 = sbr.rel (%p111) target = $region16
      $region15: #{tpu_custom_call.1} parent=5 // pred_region
        // Predicated region
        $region17: #{tpu_custom_call.1} parent=15 // pred_check
          %p114 = pneg %p37
        $region18: #{tpu_custom_call.1} parent=15 // pred_check_branch
          %116 = sbr.rel (%p114) target = $region20
        $region19: #{tpu_custom_call.1} parent=15 // pred_region
          %s117 = sand.u32 %s27, 1
          %s118 = scalar_lea.sflag [#allocation3], %s117
          %s119 = sand.u32 %s27, 1
          %s120 = smul.addr %s119, 8
          %s121 = scalar_lea.vmem [#allocation2], %s120
          %s123 = ssub.s32 128, 128
          %124 = vsyncadd %s118, %s123
          %s125 = smul.addr %s17, 128
          %s126 = scalar_lea.hbm %s0, %s125
          %s128 = sshll.u32 %s121, 4
          %s129 = int_to_ptr.vmem [resolvable:$true] %s128
          %131 = dma.hbm_to_vmem [thread:$0]  %s126, 128, %s129, %s118
        $region20: #{tpu_custom_call.1} parent=15 // pred_fallthru
          _
        // Predicated region
        $region21: #{tpu_custom_call.1} parent=15 // pred_check
          %p132 = pneg %p63
        $region22: #{tpu_custom_call.1} parent=15 // pred_check_branch
          %134 = sbr.rel (%p132) target = $region24
        $region23: #{tpu_custom_call.1} parent=15 // pred_region
          %s135 = sand.u32 %s53, 1
          %s136 = scalar_lea.sflag [#allocation6], %s135
          %s137 = sand.u32 %s53, 1
          %s138 = smul.addr %s137, 8
          %s139 = scalar_lea.vmem [#allocation5], %s138
          %s141 = ssub.s32 128, 128
          %142 = vsyncadd %s136, %s141
          %s143 = smul.addr %s17, 128
          %s144 = scalar_lea.hbm %s1, %s143
          %s146 = sshll.u32 %s139, 4
          %s147 = int_to_ptr.vmem [resolvable:$true] %s146
          %149 = dma.hbm_to_vmem [thread:$0]  %s144, 128, %s147, %s136
        $region24: #{tpu_custom_call.1} parent=15 // pred_fallthru
          _
      $region16: #{tpu_custom_call.1} parent=5 // pred_fallthru
        _
      %p150 = scmp.le.s32.totalorder 1, %s17
      %p151 = scmp.lt.s32.totalorder %s17, 3
      %p152 = pnand %p150, %p151
      %p153 = pneg %p152
      // Predicated region
      $region25: #{tpu_custom_call.1} parent=5 // pred_check
        _
      $region26: #{tpu_custom_call.1} parent=5 // pred_check_branch
        %155 = sbr.rel (%p152) target = $region28
      $region27: #{tpu_custom_call.1} parent=5 // pred_region
        %s156 = ssub.s32 %s17, 1
        %s157 = sand.u32 %s30, 1
        %s158 = scalar_lea.sflag [#allocation3], %s157
        %s159 = sand.u32 %s30, 1
        %s160 = smul.addr %s159, 8
        %s161 = scalar_lea.vmem [#allocation2], %s160
        // Predicated region
        $region29: #{tpu_custom_call.1} parent=27 // pred_check
          %p162 = pneg %p43
        $region30: #{tpu_custom_call.1} parent=27 // pred_check_branch
          %164 = sbr.rel (%p162) target = $region32
        $region31: #{tpu_custom_call.1} parent=27 // pred_region
          %165 = dma.done %s158, 128
        $region32: #{tpu_custom_call.1} parent=27 // pred_fallthru
          _
        %s166 = sand.u32 %s56, 1
        %s167 = scalar_lea.sflag [#allocation6], %s166
        %s168 = sand.u32 %s56, 1
        %s169 = smul.addr %s168, 8
        %s170 = scalar_lea.vmem [#allocation5], %s169
        // Predicated region
        $region33: #{tpu_custom_call.1} parent=27 // pred_check
          %p171 = pneg %p69
        $region34: #{tpu_custom_call.1} parent=27 // pred_check_branch
          %173 = sbr.rel (%p171) target = $region36
        $region35: #{tpu_custom_call.1} parent=27 // pred_region
          %174 = dma.done %s167, 128
        $region36: #{tpu_custom_call.1} parent=27 // pred_fallthru
          _
        %s175 = sand.u32 %s30, 1
        %s176 = scalar_lea.sflag [#allocation3], %s175
        %s177 = sand.u32 %s30, 1
        %s178 = smul.addr %s177, 8
        %s179 = scalar_lea.vmem [#allocation2], %s178
        %p180 = pneg %p43
        %p181 = pneg %p40
        %s182 = sand.u32 %s56, 1
        %s183 = scalar_lea.sflag [#allocation6], %s182
        %s184 = sand.u32 %s56, 1
        %s185 = smul.addr %s184, 8
        %s186 = scalar_lea.vmem [#allocation5], %s185
        %p187 = pneg %p69
        %p188 = pneg %p66
        %p189 = pneg %p95
        %p190 = pneg %p92
        %s191 = sand.u32 %s82, 1
        %s192 = scalar_lea.sflag [#allocation4], %s191
        %s193 = sand.u32 %s82, 1
        %s194 = smul.addr %s193, 8
        %s195 = scalar_lea.vmem [#allocation7], %s194
        %v196 = vld [vmem:[%s161] sm:$0xff]
        %v197 = vld [vmem:[%s170] sm:$0xff]
        %v198 = vadd.f32 %v197, 1e-08
        %v199 = vlog2.pop %v198
        %v200 = vmul.f32 %v199, 0.6931472
        %v201 = vsub.f32 %v200, %v196
        %v202 = vmul.f32 %v197, %v201
        %203 = vadd.xlane.f32.xlu0 %v202
        %v204 = vpop.xlane.xlu0 %203
        %205 = vmax.xlane.f32.xlu0 %v196
        %v206 = vpop.xlane.xlu0 %205
        %v207 = vsub.f32 %v196, %v206
        %v208 = vmul.f32 %v207, 1.442695
        %v209 = vpow.pop %v208
        %210 = vadd.xlane.f32.xlu0 %v209
        %v211 = vpop.xlane.xlu0 %210
        %v212 = vlog2.pop %v211
        %v213 = vmul.f32 %v212, 0.6931472
        %v214 = vadd.f32 %v206, %v213
        %v215 = vlaneseq
        %v216 = vand.u32 %v215, 127
        %217 = vadd.xlane.f32.xlu0 %v197
        %v218 = vpop.xlane.xlu0 %217
        %vm219 = vcmp.eq.s32.totalorder %v216, 0
        %vm220 = vcmp.eq.s32.totalorder %v216, 1
        %v221 = vsel %vm220, %v204, %v218
        %v222 = vsel %vm219, %v214, %v221
        %223 = vst [vmem:[%s195] sm:$0xff] %v222
        %s224 = sand.u32 %s82, 1
        %s225 = scalar_lea.sflag [#allocation4], %s224
        %s226 = sand.u32 %s82, 1
        %s227 = smul.addr %s226, 8
        %s228 = scalar_lea.vmem [#allocation7], %s227
        // Predicated region
        $region37: #{tpu_custom_call.1} parent=27 // pred_check
          %p229 = pneg %p92
        $region38: #{tpu_custom_call.1} parent=27 // pred_check_branch
          %231 = sbr.rel (%p229) target = $region40
        $region39: #{tpu_custom_call.1} parent=27 // pred_region
          %s233 = ssub.s32 128, 128
          %234 = vsyncadd %s225, %s233
          %s235 = smul.addr %s22, 128
          %s236 = scalar_lea.hbm %s2, %s235
          %s238 = sshll.u32 %s228, 4
          %s239 = int_to_ptr.vmem [resolvable:$true] %s238
          %241 = dma.vmem_to_hbm [thread:$0]  %s239, 128, %s236, %s225
        $region40: #{tpu_custom_call.1} parent=27 // pred_fallthru
          _
      $region28: #{tpu_custom_call.1} parent=5 // pred_fallthru
        _
      %p242 = scmp.le.s32.totalorder 2, %s17
      // Predicated region
      $region41: #{tpu_custom_call.1} parent=5 // pred_check
        %p243 = pneg %p242
      $region42: #{tpu_custom_call.1} parent=5 // pred_check_branch
        %245 = sbr.rel (%p243) target = $region44
      $region43: #{tpu_custom_call.1} parent=5 // pred_region
        %s246 = ssub.s32 %s17, 2
        // Predicated region
        $region45: #{tpu_custom_call.1} parent=43 // pred_check
          %p247 = pneg %p98
        $region46: #{tpu_custom_call.1} parent=43 // pred_check_branch
          %249 = sbr.rel (%p247) target = $region48
        $region47: #{tpu_custom_call.1} parent=43 // pred_region
          %s250 = sand.u32 %s83, 1
          %s251 = scalar_lea.sflag [#allocation4], %s250
          %s252 = sand.u32 %s83, 1
          %s253 = smul.addr %s252, 8
          %s254 = scalar_lea.vmem [#allocation7], %s253
          %255 = dma.done %s251, 128
        $region48: #{tpu_custom_call.1} parent=43 // pred_fallthru
          _
      $region44: #{tpu_custom_call.1} parent=5 // pred_fallthru
        _
    $region6: #{tpu_custom_call.1} parent=1 // loop_footer
      %s21 = sadd.s32 1, %s17
    $region7: #{tpu_custom_call.1} parent=1 // loop_footer_branch
      %16 = sbr.rel target = $region3
    $region8: #{tpu_custom_call.1} parent=1 // loop_exit
      _
    %256 = vsyncpa [#allocation3], 1
    %s257 = scalar_lea.sflag [#allocation3], 1
    %258 = vsyncpa %s257, 1
    %259 = vsyncpa [#allocation6], 1
    %s260 = scalar_lea.sflag [#allocation6], 1
    %261 = vsyncpa %s260, 1
    %262 = vsyncpa [#allocation4], 1
    %s263 = scalar_lea.sflag [#allocation4], 1
    %264 = vsyncpa %s263, 1

</llo_original>
